<compile_context>
chip_gen: v5e
topology: v5e:2x2
jax: 0.10.0
libtpu: 0.0.40
codegen_flags: <defaults>
</compile_context>

<pallas_src>
import numpy as np
import jax
import jax.numpy as jnp
from jax.experimental import pallas as pl
from jax.experimental.pallas import tpu as pltpu


# ---------------------------------------------------------------------------
# Host-side constant construction (pure numpy glue).
# ---------------------------------------------------------------------------
def make_parity_selectors(n):
  """Se picks even rows, So picks odd rows: shape (n//2, n)."""
  se = np.zeros((n // 2, n), dtype=np.float32)
  so = np.zeros((n // 2, n), dtype=np.float32)
  idx = np.arange(n // 2)
  se[idx, 2 * idx] = 1.0
  so[idx, 2 * idx + 1] = 1.0
  return se, so


def _cubic_weights(t, a=-0.75):
  def w1(x):  # |x| <= 1
    return (a + 2.0) * x ** 3 - (a + 3.0) * x ** 2 + 1.0

  def w2(x):  # 1 < |x| < 2
    return a * x ** 3 - 5.0 * a * x ** 2 + 8.0 * a * x - 4.0 * a

  return np.array([w2(t + 1.0), w1(t), w1(1.0 - t), w2(2.0 - t)],
                  dtype=np.float64)


def make_bicubic_x2_matrix(n):
  """B (2n, n) s.t. B @ v == 1-D bicubic x2 upsample of v
  (PyTorch semantics: align_corners=False, A=-0.75, clamped borders)."""
  m = np.zeros((2 * n, n), dtype=np.float64)
  for i in range(2 * n):
    src = (i + 0.5) * 0.5 - 0.5
    fl = int(np.floor(src))
    frac = src - fl
    w = _cubic_weights(frac)
    for k in range(4):
      idx = min(max(fl - 1 + k, 0), n - 1)
      m[i, idx] += w[k]
  return m.astype(np.float32)


def build_constants(n, c, h, w, w_model, b_model):
  """Constant operands for the fused kernel, in the (H, N*C*W) lane layout."""
  hs, ws = h // 2, w // 2
  nc = n * c

  se_h, so_h = make_parity_selectors(h)          # (Hs, H)
  se_w, so_w = make_parity_selectors(w)          # (Ws, W)
  # Row selectors with the 0.5 down-sample weight folded in.
  #   (sa @ x) @ cse + (sb @ x) @ cso == [down1; down2]   (rows stacked)
  s_a = 0.5 * np.concatenate([se_h, so_h], axis=0)   # (H, H) even rows first
  s_b = 0.5 * np.concatenate([so_h, se_h], axis=0)   # (H, H) odd rows first

  eye_nc = np.eye(nc, dtype=np.float32)
  cse = np.kron(eye_nc, se_w.T)                  # (NC*W, NC*Ws) even cols
  cso = np.kron(eye_nc, so_w.T)                  # (NC*W, NC*Ws) odd cols

  bh = make_bicubic_x2_matrix(hs)                # (H, Hs)  row bicubic
  bw = make_bicubic_x2_matrix(ws)                # (W, Ws)
  bh2 = np.kron(np.eye(2, dtype=np.float32), bh)  # (2H, H)  per-half rows
  cbw = np.kron(eye_nc, bw.T)                    # (NC*Ws, NC*W) col bicubic

  r = np.eye(c, dtype=np.float32) - w_model      # residual 1x1 conv (I - W)
  rk_full = np.kron(np.kron(np.eye(n, dtype=np.float32), r.T),
                    np.eye(w, dtype=np.float32))   # (NC*W, NC*W)
  rk_ds = np.kron(np.kron(np.eye(n, dtype=np.float32), r.T),
                  np.eye(ws, dtype=np.float32))    # (NC*Ws, NC*Ws)

  bias_full = np.tile(np.repeat(b_model, w), n).reshape(1, nc * w)
  bias_ds = np.tile(np.repeat(b_model, ws), n).reshape(1, nc * ws)

  consts = dict(
      s_a=s_a, s_b=s_b, cse=cse, cso=cso,
      rk_full=rk_full, rk_ds=rk_ds,
      bias_full=bias_full, bias_ds=bias_ds,
      bh2=bh2, cbw=cbw,
      # reference-only matrices (not used by the kernel):
      se_h=se_h, so_h=so_h, se_w=se_w, so_w=so_w, bh=bh, bw=bw,
  )
  return {k: jnp.asarray(v, dtype=jnp.float32) for k, v in consts.items()}


# ---------------------------------------------------------------------------
# Fused Pallas kernel: whole Custom_Loss forward -> one SMEM scalar.
# ---------------------------------------------------------------------------
def _custom_loss_kernel(x_ref, sa_ref, sb_ref, cse_ref, cso_ref, rkf_ref,
                        rkd_ref, bf_ref, bd_ref, bh2_ref, cbw_ref, loss_ref):
  dot = lambda a, b: jnp.dot(a, b, preferred_element_type=jnp.float32)

  x = x_ref[...]            # (H, N*C*W)   = (16, 128)
  sa = sa_ref[...]          # (H, H)         0.5 * [Se_h; So_h]
  sb = sb_ref[...]          # (H, H)         0.5 * [So_h; Se_h]
  cse = cse_ref[...]        # (NCW, NCWs)    I_NC (x) Se_w^T
  cso = cso_ref[...]        # (NCW, NCWs)    I_NC (x) So_w^T
  rkf = rkf_ref[...]        # (NCW, NCW)     I_N (x) (I-W)^T (x) I_W
  rkd = rkd_ref[...]        # (NCWs, NCWs)
  bias_f = bf_ref[...]      # (1, NCW)       b[c] broadcast row
  bias_d = bd_ref[...]      # (1, NCWs)
  bh2 = bh2_ref[...]        # (2H, H)        I_2 (x) Bh  (row bicubic, per half)
  cbw = cbw_ref[...]        # (NCWs, NCW)    I_NC (x) Bw^T

  h = x.shape[0]
  hs = h // 2

  def down(img):
    # Returns [down1; down2] row-stacked, shape (H, NCWs).
    #   sa@img = [even rows; odd rows], @cse keeps even cols -> [ee; oe]
    #   sb@img = [odd rows; even rows], @cso keeps odd cols  -> [oo; eo]
    #   sum (0.5 folded into sa/sb)  ->  [0.5(ee+oo); 0.5(oe+eo)] = [d1; d2]
    return dot(sa, dot(img, cse)) + dot(sb, dot(img, cso))

  residual_full = lambda y: dot(y, rkf) - bias_f   # y - model(y), full res
  residual_ds = lambda y: dot(y, rkd) - bias_d     # y - model(y), half res
  up = lambda y: dot(dot(bh2, y), cbw)             # separable bicubic x2,
                                                   # applied to each row-half

  def sse(a, b):
    d = a - b
    return jnp.sum(d * d)

  d = down(x)                    # [down1;  down2 ]       (16, 64)
  pred = residual_ds(d)          # [pred1;  pred2 ]       (16, 64)
  noise = residual_full(x)       # x - model(x)           (16, 128)
  nd = down(noise)               # [noise1; noise2]       (16, 64)
  u = up(d)                      # [up1;    up2   ]       (32, 128)
  up_pred = residual_full(u)     # [up_pred1; up_pred2]   (32, 128)
  un = up(nd)                    # [up_noise1; up_noise2] (32, 128)

  inv_ds = 1.0 / float(hs * d.shape[1])   # 1 / numel(down1)
  inv_up = 1.0 / float(h * u.shape[1])    # 1 / numel(up1)

  loss1 = sse(pred[:hs], d[hs:]) * inv_ds
  loss2 = 0.5 * sse(pred, nd) * inv_ds          # = 0.5*(mse(p1,n1)+mse(p2,n2))
  loss3 = sse(up_pred[:h], u[h:]) * inv_up
  loss4 = 0.5 * sse(un, up_pred) * inv_up       # = 0.5*(mse(un1,up1)+mse(un2,up2))

  loss_ref[0] = loss1 + loss2 + loss3 + loss4


def custom_loss(noise_images, consts):
  """Full Custom_Loss forward as a single pallas_call."""
  n, c, h, w = noise_images.shape
  # lane-dense layout: rows = H, lanes = (n, c, w) flattened -> (16, 128)
  x = jnp.transpose(noise_images, (2, 0, 1, 3)).reshape(h, n * c * w)
  loss = pl.pallas_call(
      _custom_loss_kernel,
      out_shape=jax.ShapeDtypeStruct((1,), jnp.float32),
      in_specs=[pl.BlockSpec(memory_space=pltpu.MemorySpace.VMEM)
                for _ in range(11)],
      out_specs=pl.BlockSpec(memory_space=pltpu.MemorySpace.SMEM),
  )(x, consts["s_a"], consts["s_b"], consts["cse"], consts["cso"],
    consts["rk_full"], consts["rk_ds"], consts["bias_full"],
    consts["bias_ds"], consts["bh2"], consts["cbw"])
  return loss[0]


# ---------------------------------------------------------------------------
# Pure-JAX reference (straightforward NCHW ops) for a sanity check.
# ---------------------------------------------------------------------------
def reference_loss(x, w_model, b_model, consts):
  se_h, so_h = consts["se_h"], consts["so_h"]
  se_w, so_w = consts["se_w"], consts["so_w"]
  bh, bw = consts["bh"], consts["bw"]

  def model(y):
    return (jnp.einsum('dc,nchw->ndhw', w_model, y)
            + b_model[None, :, None, None])

  def down(y):
    e = jnp.einsum('ih,nchw->nciw', se_h, y)
    o = jnp.einsum('ih,nchw->nciw', so_h, y)
    ee = jnp.einsum('jw,nciw->ncij', se_w, e)
    oo = jnp.einsum('jw,nciw->ncij', so_w, o)
    eo = jnp.einsum('jw,nciw->ncij', so_w, e)
    oe = jnp.einsum('jw,nciw->ncij', se_w, o)
    return 0.5 * (ee + oo), 0.5 * (eo + oe)

  def up(y):
    t = jnp.einsum('IH,ncHw->ncIw', bh, y)
    return jnp.einsum('JW,ncIW->ncIJ', bw, t)

  mse = lambda a, b: jnp.mean((a - b) ** 2)

  d1, d2 = down(x)
  pred1 = d1 - model(d1)
  pred2 = d2 - model(d2)
  loss1 = mse(pred1, d2)
  noise = x - model(x)
  n1, n2 = down(noise)
  loss2 = 0.5 * (mse(pred1, n1) + mse(pred2, n2))
  u1, u2 = up(d1), up(d2)
  up1 = u1 - model(u1)
  up2 = u2 - model(u2)
  loss3 = mse(up1, u2)
  un1, un2 = up(n1), up(n2)
  loss4 = 0.5 * (mse(un1, up1) + mse(un2, up2))
  return loss1 + loss2 + loss3 + loss4


if __name__ == "__main__":
  N, C, H, W = 2, 4, 16, 16

  key = jax.random.PRNGKey(0)
  kx, kw, kb = jax.random.split(key, 3)
  noise_images = jax.random.normal(kx, (N, C, H, W), dtype=jnp.float32)

  # Deterministic synthetic "model": 1x1 conv, C -> C.
  # TODO(synk): the reference wraps an arbitrary nn.Module; a fixed 1x1 conv
  #             stands in for it here (folded into the kernel as I - W, b).
  w_model = 0.1 * jax.random.normal(kw, (C, C), dtype=jnp.float32)
  b_model = 0.01 * jax.random.normal(kb, (C,), dtype=jnp.float32)

  consts = build_constants(N, C, H, W,
                           np.asarray(w_model), np.asarray(b_model))

  loss_fn = jax.jit(custom_loss)
  total = jax.block_until_ready(loss_fn(noise_images, consts))

  ref = jax.block_until_ready(
      jax.jit(reference_loss)(noise_images, w_model, b_model, consts))

  assert jnp.isfinite(total), "loss is not finite"
  assert abs(float(total) - float(ref)) <= 5e-2 * max(1.0, abs(float(ref))), (
      f"kernel loss {float(total)} vs reference {float(ref)}")
  print("KERNEL_OK")
</pallas_src>

<mosaic_0001>
module attributes {stable_mosaic.version = 11 : i64} {
  func.func @_custom_loss_kernel(%arg0: memref<16x128xf32, #tpu.memory_space<vmem>>, %arg1: memref<16x16xf32, #tpu.memory_space<vmem>>, %arg2: memref<16x16xf32, #tpu.memory_space<vmem>>, %arg3: memref<128x64xf32, #tpu.memory_space<vmem>>, %arg4: memref<128x64xf32, #tpu.memory_space<vmem>>, %arg5: memref<128x128xf32, #tpu.memory_space<vmem>>, %arg6: memref<64x64xf32, #tpu.memory_space<vmem>>, %arg7: memref<1x128xf32, #tpu.memory_space<vmem>>, %arg8: memref<1x64xf32, #tpu.memory_space<vmem>>, %arg9: memref<32x16xf32, #tpu.memory_space<vmem>>, %arg10: memref<64x128xf32, #tpu.memory_space<vmem>>, %arg11: memref<1xf32, #tpu.memory_space<smem>>) attributes {dimension_semantics = [], scalar_prefetch = 0 : i64, scratch_operands = 0 : i64, tpu.core_type = #tpu.core_type<tc>} {
    %c0 = arith.constant 0 : index
    %c0_0 = arith.constant 0 : index
    %0 = vector.load %arg0[%c0, %c0_0] : memref<16x128xf32, #tpu.memory_space<vmem>>, vector<16x128xf32>
    %c0_1 = arith.constant 0 : index
    %c0_2 = arith.constant 0 : index
    %1 = vector.load %arg1[%c0_1, %c0_2] : memref<16x16xf32, #tpu.memory_space<vmem>>, vector<16x16xf32>
    %c0_3 = arith.constant 0 : index
    %c0_4 = arith.constant 0 : index
    %2 = vector.load %arg2[%c0_3, %c0_4] : memref<16x16xf32, #tpu.memory_space<vmem>>, vector<16x16xf32>
    %c0_5 = arith.constant 0 : index
    %c0_6 = arith.constant 0 : index
    %3 = vector.load %arg3[%c0_5, %c0_6] : memref<128x64xf32, #tpu.memory_space<vmem>>, vector<128x64xf32>
    %c0_7 = arith.constant 0 : index
    %c0_8 = arith.constant 0 : index
    %4 = vector.load %arg4[%c0_7, %c0_8] : memref<128x64xf32, #tpu.memory_space<vmem>>, vector<128x64xf32>
    %c0_9 = arith.constant 0 : index
    %c0_10 = arith.constant 0 : index
    %5 = vector.load %arg5[%c0_9, %c0_10] : memref<128x128xf32, #tpu.memory_space<vmem>>, vector<128x128xf32>
    %c0_11 = arith.constant 0 : index
    %c0_12 = arith.constant 0 : index
    %6 = vector.load %arg6[%c0_11, %c0_12] : memref<64x64xf32, #tpu.memory_space<vmem>>, vector<64x64xf32>
    %c0_13 = arith.constant 0 : index
    %c0_14 = arith.constant 0 : index
    %7 = vector.load %arg7[%c0_13, %c0_14] : memref<1x128xf32, #tpu.memory_space<vmem>>, vector<1x128xf32>
    %c0_15 = arith.constant 0 : index
    %c0_16 = arith.constant 0 : index
    %8 = vector.load %arg8[%c0_15, %c0_16] : memref<1x64xf32, #tpu.memory_space<vmem>>, vector<1x64xf32>
    %c0_17 = arith.constant 0 : index
    %c0_18 = arith.constant 0 : index
    %9 = vector.load %arg9[%c0_17, %c0_18] : memref<32x16xf32, #tpu.memory_space<vmem>>, vector<32x16xf32>
    %c0_19 = arith.constant 0 : index
    %c0_20 = arith.constant 0 : index
    %10 = vector.load %arg10[%c0_19, %c0_20] : memref<64x128xf32, #tpu.memory_space<vmem>>, vector<64x128xf32>
    %cst = arith.constant dense<0.000000e+00> : vector<16x64xf32>
    %11 = tpu.matmul %0, %3, %cst {dimension_numbers = #tpu.dot_dimension_numbers<[1], [0], [0], [1], [0, 0, 1, 1], [], []>} : vector<16x128xf32>, vector<128x64xf32>, vector<16x64xf32> -> vector<16x64xf32>
    %cst_21 = arith.constant dense<0.000000e+00> : vector<16x64xf32>
    %12 = tpu.matmul %1, %11, %cst_21 {dimension_numbers = #tpu.dot_dimension_numbers<[1], [0], [0], [1], [0, 0, 1, 1], [], []>} : vector<16x16xf32>, vector<16x64xf32>, vector<16x64xf32> -> vector<16x64xf32>
    %cst_22 = arith.constant dense<0.000000e+00> : vector<16x64xf32>
    %13 = tpu.matmul %0, %4, %cst_22 {dimension_numbers = #tpu.dot_dimension_numbers<[1], [0], [0], [1], [0, 0, 1, 1], [], []>} : vector<16x128xf32>, vector<128x64xf32>, vector<16x64xf32> -> vector<16x64xf32>
    %cst_23 = arith.constant dense<0.000000e+00> : vector<16x64xf32>
    %14 = tpu.matmul %2, %13, %cst_23 {dimension_numbers = #tpu.dot_dimension_numbers<[1], [0], [0], [1], [0, 0, 1, 1], [], []>} : vector<16x16xf32>, vector<16x64xf32>, vector<16x64xf32> -> vector<16x64xf32>
    %15 = arith.addf %12, %14 : vector<16x64xf32>
    %cst_24 = arith.constant dense<0.000000e+00> : vector<16x64xf32>
    %16 = tpu.matmul %15, %6, %cst_24 {dimension_numbers = #tpu.dot_dimension_numbers<[1], [0], [0], [1], [0, 0, 1, 1], [], []>} : vector<16x64xf32>, vector<64x64xf32>, vector<16x64xf32> -> vector<16x64xf32>
    %17 = vector.broadcast %8 : vector<1x64xf32> to vector<16x64xf32>
    %18 = arith.subf %16, %17 : vector<16x64xf32>
    %cst_25 = arith.constant dense<0.000000e+00> : vector<16x128xf32>
    %19 = tpu.matmul %0, %5, %cst_25 {dimension_numbers = #tpu.dot_dimension_numbers<[1], [0], [0], [1], [0, 0, 1, 1], [], []>} : vector<16x128xf32>, vector<128x128xf32>, vector<16x128xf32> -> vector<16x128xf32>
    %20 = vector.broadcast %7 : vector<1x128xf32> to vector<16x128xf32>
    %21 = arith.subf %19, %20 : vector<16x128xf32>
    %cst_26 = arith.constant dense<0.000000e+00> : vector<16x64xf32>
    %22 = tpu.matmul %21, %3, %cst_26 {dimension_numbers = #tpu.dot_dimension_numbers<[1], [0], [0], [1], [0, 0, 1, 1], [], []>} : vector<16x128xf32>, vector<128x64xf32>, vector<16x64xf32> -> vector<16x64xf32>
    %cst_27 = arith.constant dense<0.000000e+00> : vector<16x64xf32>
    %23 = tpu.matmul %1, %22, %cst_27 {dimension_numbers = #tpu.dot_dimension_numbers<[1], [0], [0], [1], [0, 0, 1, 1], [], []>} : vector<16x16xf32>, vector<16x64xf32>, vector<16x64xf32> -> vector<16x64xf32>
    %cst_28 = arith.constant dense<0.000000e+00> : vector<16x64xf32>
    %24 = tpu.matmul %21, %4, %cst_28 {dimension_numbers = #tpu.dot_dimension_numbers<[1], [0], [0], [1], [0, 0, 1, 1], [], []>} : vector<16x128xf32>, vector<128x64xf32>, vector<16x64xf32> -> vector<16x64xf32>
    %cst_29 = arith.constant dense<0.000000e+00> : vector<16x64xf32>
    %25 = tpu.matmul %2, %24, %cst_29 {dimension_numbers = #tpu.dot_dimension_numbers<[1], [0], [0], [1], [0, 0, 1, 1], [], []>} : vector<16x16xf32>, vector<16x64xf32>, vector<16x64xf32> -> vector<16x64xf32>
    %26 = arith.addf %23, %25 : vector<16x64xf32>
    %cst_30 = arith.constant dense<0.000000e+00> : vector<32x64xf32>
    %27 = tpu.matmul %9, %15, %cst_30 {dimension_numbers = #tpu.dot_dimension_numbers<[1], [0], [0], [1], [0, 0, 1, 1], [], []>} : vector<32x16xf32>, vector<16x64xf32>, vector<32x64xf32> -> vector<32x64xf32>
    %cst_31 = arith.constant dense<0.000000e+00> : vector<32x128xf32>
    %28 = tpu.matmul %27, %10, %cst_31 {dimension_numbers = #tpu.dot_dimension_numbers<[1], [0], [0], [1], [0, 0, 1, 1], [], []>} : vector<32x64xf32>, vector<64x128xf32>, vector<32x128xf32> -> vector<32x128xf32>
    %cst_32 = arith.constant dense<0.000000e+00> : vector<32x128xf32>
    %29 = tpu.matmul %28, %5, %cst_32 {dimension_numbers = #tpu.dot_dimension_numbers<[1], [0], [0], [1], [0, 0, 1, 1], [], []>} : vector<32x128xf32>, vector<128x128xf32>, vector<32x128xf32> -> vector<32x128xf32>
    %30 = vector.broadcast %7 : vector<1x128xf32> to vector<32x128xf32>
    %31 = arith.subf %29, %30 : vector<32x128xf32>
    %cst_33 = arith.constant dense<0.000000e+00> : vector<32x64xf32>
    %32 = tpu.matmul %9, %26, %cst_33 {dimension_numbers = #tpu.dot_dimension_numbers<[1], [0], [0], [1], [0, 0, 1, 1], [], []>} : vector<32x16xf32>, vector<16x64xf32>, vector<32x64xf32> -> vector<32x64xf32>
    %cst_34 = arith.constant dense<0.000000e+00> : vector<32x128xf32>
    %33 = tpu.matmul %32, %10, %cst_34 {dimension_numbers = #tpu.dot_dimension_numbers<[1], [0], [0], [1], [0, 0, 1, 1], [], []>} : vector<32x64xf32>, vector<64x128xf32>, vector<32x128xf32> -> vector<32x128xf32>
    %34 = vector.extract_strided_slice %18 {offsets = [0, 0], sizes = [8, 64], strides = [1, 1]} : vector<16x64xf32> to vector<8x64xf32>
    %35 = vector.extract_strided_slice %15 {offsets = [8, 0], sizes = [8, 64], strides = [1, 1]} : vector<16x64xf32> to vector<8x64xf32>
    %36 = arith.subf %34, %35 : vector<8x64xf32>
    %37 = arith.mulf %36, %36 : vector<8x64xf32>
    %38 = vector.shape_cast %37 : vector<8x64xf32> to vector<1x8x64xf32>
    %cst_35 = arith.constant dense<0.000000e+00> : vector<1xf32>
    %39 = vector.multi_reduction <add>, %38, %cst_35 [1, 2] : vector<1x8x64xf32> to vector<1xf32>
    %40 = vector.shape_cast %39 : vector<1xf32> to vector<1x1x1xf32>
    %41 = vector.extract %40[0, 0, 0] : f32 from vector<1x1x1xf32>
    %cst_36 = arith.constant 0.001953125 : f32
    %42 = arith.mulf %41, %cst_36 : f32
    %43 = arith.subf %18, %26 : vector<16x64xf32>
    %44 = arith.mulf %43, %43 : vector<16x64xf32>
    %45 = vector.shape_cast %44 : vector<16x64xf32> to vector<1x16x64xf32>
    %cst_37 = arith.constant dense<0.000000e+00> : vector<1xf32>
    %46 = vector.multi_reduction <add>, %45, %cst_37 [1, 2] : vector<1x16x64xf32> to vector<1xf32>
    %47 = vector.shape_cast %46 : vector<1xf32> to vector<1x1x1xf32>
    %48 = vector.extract %47[0, 0, 0] : f32 from vector<1x1x1xf32>
    %cst_38 = arith.constant 5.000000e-01 : f32
    %49 = arith.mulf %cst_38, %48 : f32
    %cst_39 = arith.constant 0.001953125 : f32
    %50 = arith.mulf %49, %cst_39 : f32
    %51 = vector.extract_strided_slice %31 {offsets = [0, 0], sizes = [16, 128], strides = [1, 1]} : vector<32x128xf32> to vector<16x128xf32>
    %52 = vector.extract_strided_slice %28 {offsets = [16, 0], sizes = [16, 128], strides = [1, 1]} : vector<32x128xf32> to vector<16x128xf32>
    %53 = arith.subf %51, %52 : vector<16x128xf32>
    %54 = arith.mulf %53, %53 : vector<16x128xf32>
    %55 = vector.shape_cast %54 : vector<16x128xf32> to vector<1x16x128xf32>
    %cst_40 = arith.constant dense<0.000000e+00> : vector<1xf32>
    %56 = vector.multi_reduction <add>, %55, %cst_40 [1, 2] : vector<1x16x128xf32> to vector<1xf32>
    %57 = vector.shape_cast %56 : vector<1xf32> to vector<1x1x1xf32>
    %58 = vector.extract %57[0, 0, 0] : f32 from vector<1x1x1xf32>
    %cst_41 = arith.constant 4.8828125E-4 : f32
    %59 = arith.mulf %58, %cst_41 : f32
    %60 = arith.subf %33, %31 : vector<32x128xf32>
    %61 = arith.mulf %60, %60 : vector<32x128xf32>
    %62 = vector.shape_cast %61 : vector<32x128xf32> to vector<1x32x128xf32>
    %cst_42 = arith.constant dense<0.000000e+00> : vector<1xf32>
    %63 = vector.multi_reduction <add>, %62, %cst_42 [1, 2] : vector<1x32x128xf32> to vector<1xf32>
    %64 = vector.shape_cast %63 : vector<1xf32> to vector<1x1x1xf32>
    %65 = vector.extract %64[0, 0, 0] : f32 from vector<1x1x1xf32>
    %cst_43 = arith.constant 5.000000e-01 : f32
    %66 = arith.mulf %cst_43, %65 : f32
    %cst_44 = arith.constant 4.8828125E-4 : f32
    %67 = arith.mulf %66, %cst_44 : f32
    %68 = arith.addf %42, %50 : f32
    %69 = arith.addf %68, %59 : f32
    %70 = arith.addf %69, %67 : f32
    %c0_45 = arith.constant 0 : index
    %71 = memref.load %arg11[%c0_45] : memref<1xf32, #tpu.memory_space<smem>>
    memref.store %70, %arg11[%c0_45] : memref<1xf32, #tpu.memory_space<smem>>
    return
  }
}

</mosaic_0001>

<llo_original>
// kernel: custom_loss.1
$region0: #{custom_loss.1}
  #allocation0 [shape = 'u32[]', space=smem, size = 0x4, offset = 0x4, fixed_abs, tag = 'smem constant byte address 0x4 - core index']
  #allocation1 [shape = 'u32[72,128]{1,0:T(1,128)}', space=vmem, size = 0x9000, scoped, tag = 'internal scratch']
  %s0 = inlined_call_operand.vmem [shape: f32[16,128], index: 0, kind: input, shape index: {}]
  %s1 = inlined_call_operand.vmem [shape: f32[16,16], index: 1, kind: input, shape index: {}]
  %s2 = inlined_call_operand.vmem [shape: f32[16,16], index: 2, kind: input, shape index: {}]
  %s3 = inlined_call_operand.vmem [shape: f32[128,64], index: 3, kind: input, shape index: {}]
  %s4 = inlined_call_operand.vmem [shape: f32[128,64], index: 4, kind: input, shape index: {}]
  %s5 = inlined_call_operand.vmem [shape: f32[128,128], index: 5, kind: input, shape index: {}]
  %s6 = inlined_call_operand.vmem [shape: f32[64,64], index: 6, kind: input, shape index: {}]
  %s7 = inlined_call_operand.vmem [shape: f32[1,128], index: 7, kind: input, shape index: {}]
  %s8 = inlined_call_operand.vmem [shape: f32[1,64], index: 8, kind: input, shape index: {}]
  %s9 = inlined_call_operand.vmem [shape: f32[32,16], index: 9, kind: input, shape index: {}]
  %s10 = inlined_call_operand.vmem [shape: f32[64,128], index: 10, kind: input, shape index: {}]
  %s11 = inlined_call_operand.hbm [shape: f32[1], index: 11, kind: output, shape index: {}]
  %s12 = sld [smem:[#allocation0]]
  $region54: #{custom_loss.1} parent=0
    _
  %s14 = ssub.s32 1, %s12
  %s15 = scalar_select 0, %s14, %s12
  $region1: #{custom_loss.1} parent=0
    #allocation2 [shape = 'u8[512]{0}', space=smem, size = 0x200, scoped, tag = 'output window, operand 0, single buffered']
    #allocation3 [shape = 's32[1]{0}', space=sflag, size = 0x4, scoped, tag = 'scoped memory for custom_loss.1']
    %16 = vsyncpa [#allocation3], 0
    // Predicated region
    $region2: #{custom_loss.1} parent=1 // pred_check
      _
    $region3: #{custom_loss.1} parent=1 // pred_check_branch
      %18 = sbr.rel (0) target = $region5
    $region4: #{custom_loss.1} parent=1 // pred_region
      _
    $region5: #{custom_loss.1} parent=1 // pred_fallthru
      _
    // Predicated region
    $region6: #{custom_loss.1} parent=1 // pred_check
      _
    $region7: #{custom_loss.1} parent=1 // pred_check_branch
      %20 = sbr.rel (0) target = $region9
    $region8: #{custom_loss.1} parent=1 // pred_region
      _
    $region9: #{custom_loss.1} parent=1 // pred_fallthru
      _
    // Predicated region
    $region10: #{custom_loss.1} parent=1 // pred_check
      _
    $region11: #{custom_loss.1} parent=1 // pred_check_branch
      %22 = sbr.rel (0) target = $region13
    $region12: #{custom_loss.1} parent=1 // pred_region
      _
    $region13: #{custom_loss.1} parent=1 // pred_fallthru
      _
    // Predicated region
    $region14: #{custom_loss.1} parent=1 // pred_check
      _
    $region15: #{custom_loss.1} parent=1 // pred_check_branch
      %24 = sbr.rel (0) target = $region17
    $region16: #{custom_loss.1} parent=1 // pred_region
      _
    $region17: #{custom_loss.1} parent=1 // pred_fallthru
      _
    // Predicated region
    $region18: #{custom_loss.1} parent=1 // pred_check
      _
    $region19: #{custom_loss.1} parent=1 // pred_check_branch
      %26 = sbr.rel (0) target = $region21
    $region20: #{custom_loss.1} parent=1 // pred_region
      _
    $region21: #{custom_loss.1} parent=1 // pred_fallthru
      _
    // Predicated region
    $region22: #{custom_loss.1} parent=1 // pred_check
      _
    $region23: #{custom_loss.1} parent=1 // pred_check_branch
      %28 = sbr.rel (0) target = $region25
    $region24: #{custom_loss.1} parent=1 // pred_region
      _
    $region25: #{custom_loss.1} parent=1 // pred_fallthru
      _
    // Predicated region
    $region26: #{custom_loss.1} parent=1 // pred_check
      _
    $region27: #{custom_loss.1} parent=1 // pred_check_branch
      %30 = sbr.rel (0) target = $region29
    $region28: #{custom_loss.1} parent=1 // pred_region
      _
    $region29: #{custom_loss.1} parent=1 // pred_fallthru
      _
    // Predicated region
    $region30: #{custom_loss.1} parent=1 // pred_check
      _
    $region31: #{custom_loss.1} parent=1 // pred_check_branch
      %32 = sbr.rel (0) target = $region33
    $region32: #{custom_loss.1} parent=1 // pred_region
      _
    $region33: #{custom_loss.1} parent=1 // pred_fallthru
      _
    // Predicated region
    $region34: #{custom_loss.1} parent=1 // pred_check
      _
    $region35: #{custom_loss.1} parent=1 // pred_check_branch
      %34 = sbr.rel (0) target = $region37
    $region36: #{custom_loss.1} parent=1 // pred_region
      _
    $region37: #{custom_loss.1} parent=1 // pred_fallthru
      _
    // Predicated region
    $region38: #{custom_loss.1} parent=1 // pred_check
      _
    $region39: #{custom_loss.1} parent=1 // pred_check_branch
      %36 = sbr.rel (0) target = $region41
    $region40: #{custom_loss.1} parent=1 // pred_region
      _
    $region41: #{custom_loss.1} parent=1 // pred_fallthru
      _
    // Predicated region
    $region42: #{custom_loss.1} parent=1 // pred_check
      _
    $region43: #{custom_loss.1} parent=1 // pred_check_branch
      %38 = sbr.rel (0) target = $region45
    $region44: #{custom_loss.1} parent=1 // pred_region
      _
    $region45: #{custom_loss.1} parent=1 // pred_fallthru
      _
    %v39 = vld [vmem:[%s0] sm:$0xff]
    %v40 = vld [vmem:[%s0 + $0x8] sm:$0xff]
    %v41 = vld [vmem:[%s1] sm:$0xff]
    %v42 = vld [vmem:[%s1 + $0x8] sm:$0xff]
    %v43 = vld [vmem:[%s2] sm:$0xff]
    %v44 = vld [vmem:[%s2 + $0x8] sm:$0xff]
    %v45 = vld [vmem:[%s3] sm:$0xff]
    %v46 = vld [vmem:[%s3 + $0x8] sm:$0xff]
    %v47 = vld [vmem:[%s3 + $0x10] sm:$0xff]
    %v48 = vld [vmem:[%s3 + $0x18] sm:$0xff]
    %v49 = vld [vmem:[%s3 + $0x20] sm:$0xff]
    %v50 = vld [vmem:[%s3 + $0x28] sm:$0xff]
    %v51 = vld [vmem:[%s3 + $0x30] sm:$0xff]
    %v52 = vld [vmem:[%s3 + $0x38] sm:$0xff]
    %v53 = vld [vmem:[%s3 + $0x40] sm:$0xff]
    %v54 = vld [vmem:[%s3 + $0x48] sm:$0xff]
    %v55 = vld [vmem:[%s3 + $0x50] sm:$0xff]
    %v56 = vld [vmem:[%s3 + $0x58] sm:$0xff]
    %v57 = vld [vmem:[%s3 + $0x60] sm:$0xff]
    %v58 = vld [vmem:[%s3 + $0x68] sm:$0xff]
    %v59 = vld [vmem:[%s3 + $0x70] sm:$0xff]
    %v60 = vld [vmem:[%s3 + $0x78] sm:$0xff]
    %v61 = vld [vmem:[%s4] sm:$0xff]
    %v62 = vld [vmem:[%s4 + $0x8] sm:$0xff]
    %v63 = vld [vmem:[%s4 + $0x10] sm:$0xff]
    %v64 = vld [vmem:[%s4 + $0x18] sm:$0xff]
    %v65 = vld [vmem:[%s4 + $0x20] sm:$0xff]
    %v66 = vld [vmem:[%s4 + $0x28] sm:$0xff]
    %v67 = vld [vmem:[%s4 + $0x30] sm:$0xff]
    %v68 = vld [vmem:[%s4 + $0x38] sm:$0xff]
    %v69 = vld [vmem:[%s4 + $0x40] sm:$0xff]
    %v70 = vld [vmem:[%s4 + $0x48] sm:$0xff]
    %v71 = vld [vmem:[%s4 + $0x50] sm:$0xff]
    %v72 = vld [vmem:[%s4 + $0x58] sm:$0xff]
    %v73 = vld [vmem:[%s4 + $0x60] sm:$0xff]
    %v74 = vld [vmem:[%s4 + $0x68] sm:$0xff]
    %v75 = vld [vmem:[%s4 + $0x70] sm:$0xff]
    %v76 = vld [vmem:[%s4 + $0x78] sm:$0xff]
    %v77 = vld [vmem:[%s5] sm:$0xff]
    %v78 = vld [vmem:[%s5 + $0x8] sm:$0xff]
    %v79 = vld [vmem:[%s5 + $0x10] sm:$0xff]
    %v80 = vld [vmem:[%s5 + $0x18] sm:$0xff]
    %v81 = vld [vmem:[%s5 + $0x20] sm:$0xff]
    %v82 = vld [vmem:[%s5 + $0x28] sm:$0xff]
    %v83 = vld [vmem:[%s5 + $0x30] sm:$0xff]
    %v84 = vld [vmem:[%s5 + $0x38] sm:$0xff]
    %v85 = vld [vmem:[%s5 + $0x40] sm:$0xff]
    %v86 = vld [vmem:[%s5 + $0x48] sm:$0xff]
    %v87 = vld [vmem:[%s5 + $0x50] sm:$0xff]
    %v88 = vld [vmem:[%s5 + $0x58] sm:$0xff]
    %v89 = vld [vmem:[%s5 + $0x60] sm:$0xff]
    %v90 = vld [vmem:[%s5 + $0x68] sm:$0xff]
    %v91 = vld [vmem:[%s5 + $0x70] sm:$0xff]
    %v92 = vld [vmem:[%s5 + $0x78] sm:$0xff]
    %v93 = vld [vmem:[%s6] sm:$0xff]
    %v94 = vld [vmem:[%s6 + $0x8] sm:$0xff]
    %v95 = vld [vmem:[%s6 + $0x10] sm:$0xff]
    %v96 = vld [vmem:[%s6 + $0x18] sm:$0xff]
    %v97 = vld [vmem:[%s6 + $0x20] sm:$0xff]
    %v98 = vld [vmem:[%s6 + $0x28] sm:$0xff]
    %v99 = vld [vmem:[%s6 + $0x30] sm:$0xff]
    %v100 = vld [vmem:[%s6 + $0x38] sm:$0xff]
    %v101 = vld [vmem:[%s7] sm:$0x1]
    %v102 = vld [vmem:[%s8] sm:$0x1]
    %v103 = vld [vmem:[%s9] sm:$0xff]
    %v104 = vld [vmem:[%s9 + $0x8] sm:$0xff]
    %v105 = vld [vmem:[%s9 + $0x10] sm:$0xff]
    %v106 = vld [vmem:[%s9 + $0x18] sm:$0xff]
    %v107 = vld [vmem:[%s10] sm:$0xff]
    %v108 = vld [vmem:[%s10 + $0x8] sm:$0xff]
    %v109 = vld [vmem:[%s10 + $0x10] sm:$0xff]
    %v110 = vld [vmem:[%s10 + $0x18] sm:$0xff]
    %v111 = vld [vmem:[%s10 + $0x20] sm:$0xff]
    %v112 = vld [vmem:[%s10 + $0x28] sm:$0xff]
    %v113 = vld [vmem:[%s10 + $0x30] sm:$0xff]
    %v114 = vld [vmem:[%s10 + $0x38] sm:$0xff]
    %115 = vmatpush.msra.mxu0 %v60
    %116 = vmatpush.msra.mxu0 %v59
    %117 = vmatpush.msra.mxu0 %v58
    %118 = vmatpush.msra.mxu0 %v57
    %119 = vmatpush.msra.mxu0 %v56
    %120 = vmatpush.msra.mxu0 %v55
    %121 = vmatpush.msra.mxu0 %v54
    %122 = vmatpush.msra.mxu0 %v53
    %123 = vmatpush.msra.mxu0 %v52
    %124 = vmatpush.msra.mxu0 %v51
    %125 = vmatpush.msra.mxu0 %v50
    %126 = vmatpush.msra.mxu0 %v49
    %127 = vmatpush.msra.mxu0 %v48
    %128 = vmatpush.msra.mxu0 %v47
    %129 = vmatpush.msra.mxu0 %v46
    %130 = vmatpush.msra.mxu0 %v45
    %131 = vmatmul.f32.gmra.mxu0 %v39
    %v132 = vpop.f32.mrf.mxu0
    %v133 = vadd.f32 0.0, %v132
    %134 = vmatmul.f32.gmra.mxu0 %v40
    %v135 = vpop.f32.mrf.mxu0
    %v136 = vadd.f32 0.0, %v135
    %137 = vdwg.mxu0
    %138 = vmatpush.msra.mxu0 %v76
    %139 = vmatpush.msra.mxu0 %v75
    %140 = vmatpush.msra.mxu0 %v74
    %141 = vmatpush.msra.mxu0 %v73
    %142 = vmatpush.msra.mxu0 %v72
    %143 = vmatpush.msra.mxu0 %v71
    %144 = vmatpush.msra.mxu0 %v70
    %145 = vmatpush.msra.mxu0 %v69
    %146 = vmatpush.msra.mxu0 %v68
    %147 = vmatpush.msra.mxu0 %v67
    %148 = vmatpush.msra.mxu0 %v66
    %149 = vmatpush.msra.mxu0 %v65
    %150 = vmatpush.msra.mxu0 %v64
    %151 = vmatpush.msra.mxu0 %v63
    %152 = vmatpush.msra.mxu0 %v62
    %153 = vmatpush.msra.mxu0 %v61
    %154 = vmatmul.f32.gmra.mxu0 %v39
    %v155 = vpop.f32.mrf.mxu0
    %v156 = vadd.f32 0.0, %v155
    %157 = vmatmul.f32.gmra.mxu0 %v40
    %v158 = vpop.f32.mrf.mxu0
    %v159 = vadd.f32 0.0, %v158
    %160 = vdwg.mxu0
    %vm161 = vcmask 130048
    %v163 = vsel %vm161, %v43, 0
    %v166 = vsel %vm161, %v44, 0
    %168 = vmatpush.msra.mxu0 0.0
    %169 = vmatpush.msra.mxu0 0.0
    %170 = vmatpush.msra.mxu0 0.0
    %171 = vmatpush.msra.mxu0 0.0
    %172 = vmatpush.msra.mxu0 0.0
    %173 = vmatpush.msra.mxu0 0.0
    %174 = vmatpush.msra.mxu0 0.0
    %175 = vmatpush.msra.mxu0 0.0
    %176 = vmatpush.msra.mxu0 0.0
    %177 = vmatpush.msra.mxu0 0.0
    %178 = vmatpush.msra.mxu0 0.0
    %179 = vmatpush.msra.mxu0 0.0
    %180 = vmatpush.msra.mxu0 0.0
    %181 = vmatpush.msra.mxu0 0.0
    %182 = vmatpush.msra.mxu0 %v159
    %183 = vmatpush.msra.mxu0 %v156
    %184 = vmatmul.f32.gmra.mxu0 %v163
    %v185 = vpop.f32.mrf.mxu0
    %v186 = vadd.f32 0.0, %v185
    %187 = vmatmul.f32.gmra.mxu0 %v166
    %v188 = vpop.f32.mrf.mxu0
    %v189 = vadd.f32 0.0, %v188
    %190 = vdwg.mxu0
    %v192 = vsel %vm161, %v41, 0
    %v195 = vsel %vm161, %v42, 0
    %197 = vmatpush.msra.mxu0 0.0
    %198 = vmatpush.msra.mxu0 0.0
    %199 = vmatpush.msra.mxu0 0.0
    %200 = vmatpush.msra.mxu0 0.0
    %201 = vmatpush.msra.mxu0 0.0
    %202 = vmatpush.msra.mxu0 0.0
    %203 = vmatpush.msra.mxu0 0.0
    %204 = vmatpush.msra.mxu0 0.0
    %205 = vmatpush.msra.mxu0 0.0
    %206 = vmatpush.msra.mxu0 0.0
    %207 = vmatpush.msra.mxu0 0.0
    %208 = vmatpush.msra.mxu0 0.0
    %209 = vmatpush.msra.mxu0 0.0
    %210 = vmatpush.msra.mxu0 0.0
    %211 = vmatpush.msra.mxu0 %v136
    %212 = vmatpush.msra.mxu0 %v133
    %213 = vmatmul.f32.gmra.mxu0 %v192
    %v214 = vpop.f32.mrf.mxu0
    %v215 = vadd.f32 %v186, %v214
    %216 = vmatmul.f32.gmra.mxu0 %v195
    %v217 = vpop.f32.mrf.mxu0
    %v218 = vadd.f32 %v189, %v217
    %219 = vdwg.mxu0
    %vm220 = vcmask 523264
    %v222 = vsel %vm220, %v215, 0
    %v225 = vsel %vm220, %v218, 0
    %227 = vmatpush.msra.mxu0 0.0
    %228 = vmatpush.msra.mxu0 0.0
    %229 = vmatpush.msra.mxu0 0.0
    %230 = vmatpush.msra.mxu0 0.0
    %231 = vmatpush.msra.mxu0 0.0
    %232 = vmatpush.msra.mxu0 0.0
    %233 = vmatpush.msra.mxu0 0.0
    %234 = vmatpush.msra.mxu0 0.0
    %235 = vmatpush.msra.mxu0 %v100
    %236 = vmatpush.msra.mxu0 %v99
    %237 = vmatpush.msra.mxu0 %v98
    %238 = vmatpush.msra.mxu0 %v97
    %239 = vmatpush.msra.mxu0 %v96
    %240 = vmatpush.msra.mxu0 %v95
    %241 = vmatpush.msra.mxu0 %v94
    %242 = vmatpush.msra.mxu0 %v93
    %243 = vmatmul.f32.gmra.mxu0 %v222
    %v244 = vpop.f32.mrf.mxu0
    %v245 = vadd.f32 0.0, %v244
    %246 = vmatmul.f32.gmra.mxu0 %v225
    %v247 = vpop.f32.mrf.mxu0
    %v248 = vadd.f32 0.0, %v247
    %249 = vdwg.mxu0
    %v251 = vperm.slane %v102, 0
    %v253 = vsub.f32 %v245, %v251
    %v254 = vsub.f32 %v248, %v251
    %255 = vmatpush.msra.mxu0 %v92
    %256 = vmatpush.msra.mxu0 %v91
    %257 = vmatpush.msra.mxu0 %v90
    %258 = vmatpush.msra.mxu0 %v89
    %259 = vmatpush.msra.mxu0 %v88
    %260 = vmatpush.msra.mxu0 %v87
    %261 = vmatpush.msra.mxu0 %v86
    %262 = vmatpush.msra.mxu0 %v85
    %263 = vmatpush.msra.mxu0 %v84
    %264 = vmatpush.msra.mxu0 %v83
    %265 = vmatpush.msra.mxu0 %v82
    %266 = vmatpush.msra.mxu0 %v81
    %267 = vmatpush.msra.mxu0 %v80
    %268 = vmatpush.msra.mxu0 %v79
    %269 = vmatpush.msra.mxu0 %v78
    %270 = vmatpush.msra.mxu0 %v77
    %271 = vmatmul.f32.gmra.mxu0 %v39
    %v272 = vpop.f32.mrf.mxu0
    %v273 = vadd.f32 0.0, %v272
    %274 = vmatmul.f32.gmra.mxu0 %v40
    %v275 = vpop.f32.mrf.mxu0
    %v276 = vadd.f32 0.0, %v275
    %277 = vdwg.mxu0
    %v279 = vperm.slane %v101, 0
    %v281 = vsub.f32 %v273, %v279
    %v282 = vsub.f32 %v276, %v279
    %283 = vmatpush.msra.mxu0 %v60
    %284 = vmatpush.msra.mxu0 %v59
    %285 = vmatpush.msra.mxu0 %v58
    %286 = vmatpush.msra.mxu0 %v57
    %287 = vmatpush.msra.mxu0 %v56
    %288 = vmatpush.msra.mxu0 %v55
    %289 = vmatpush.msra.mxu0 %v54
    %290 = vmatpush.msra.mxu0 %v53
    %291 = vmatpush.msra.mxu0 %v52
    %292 = vmatpush.msra.mxu0 %v51
    %293 = vmatpush.msra.mxu0 %v50
    %294 = vmatpush.msra.mxu0 %v49
    %295 = vmatpush.msra.mxu0 %v48
    %296 = vmatpush.msra.mxu0 %v47
    %297 = vmatpush.msra.mxu0 %v46
    %298 = vmatpush.msra.mxu0 %v45
    %299 = vmatmul.f32.gmra.mxu0 %v281
    %v300 = vpop.f32.mrf.mxu0
    %v301 = vadd.f32 0.0, %v300
    %302 = vmatmul.f32.gmra.mxu0 %v282
    %v303 = vpop.f32.mrf.mxu0
    %v304 = vadd.f32 0.0, %v303
    %305 = vdwg.mxu0
    %306 = vmatpush.msra.mxu0 %v76
    %307 = vmatpush.msra.mxu0 %v75
    %308 = vmatpush.msra.mxu0 %v74
    %309 = vmatpush.msra.mxu0 %v73
    %310 = vmatpush.msra.mxu0 %v72
    %311 = vmatpush.msra.mxu0 %v71
    %312 = vmatpush.msra.mxu0 %v70
    %313 = vmatpush.msra.mxu0 %v69
    %314 = vmatpush.msra.mxu0 %v68
    %315 = vmatpush.msra.mxu0 %v67
    %316 = vmatpush.msra.mxu0 %v66
    %317 = vmatpush.msra.mxu0 %v65
    %318 = vmatpush.msra.mxu0 %v64
    %319 = vmatpush.msra.mxu0 %v63
    %320 = vmatpush.msra.mxu0 %v62
    %321 = vmatpush.msra.mxu0 %v61
    %322 = vmatmul.f32.gmra.mxu0 %v281
    %v323 = vpop.f32.mrf.mxu0
    %v324 = vadd.f32 0.0, %v323
    %325 = vmatmul.f32.gmra.mxu0 %v282
    %v326 = vpop.f32.mrf.mxu0
    %v327 = vadd.f32 0.0, %v326
    %328 = vdwg.mxu0
    %329 = vmatpush.msra.mxu0 0.0
    %330 = vmatpush.msra.mxu0 0.0
    %331 = vmatpush.msra.mxu0 0.0
    %332 = vmatpush.msra.mxu0 0.0
    %333 = vmatpush.msra.mxu0 0.0
    %334 = vmatpush.msra.mxu0 0.0
    %335 = vmatpush.msra.mxu0 0.0
    %336 = vmatpush.msra.mxu0 0.0
    %337 = vmatpush.msra.mxu0 0.0
    %338 = vmatpush.msra.mxu0 0.0
    %339 = vmatpush.msra.mxu0 0.0
    %340 = vmatpush.msra.mxu0 0.0
    %341 = vmatpush.msra.mxu0 0.0
    %342 = vmatpush.msra.mxu0 0.0
    %343 = vmatpush.msra.mxu0 %v327
    %344 = vmatpush.msra.mxu0 %v324
    %345 = vmatmul.f32.gmra.mxu0 %v163
    %v346 = vpop.f32.mrf.mxu0
    %v347 = vadd.f32 0.0, %v346
    %348 = vmatmul.f32.gmra.mxu0 %v166
    %v349 = vpop.f32.mrf.mxu0
    %v350 = vadd.f32 0.0, %v349
    %351 = vdwg.mxu0
    %352 = vmatpush.msra.mxu0 0.0
    %353 = vmatpush.msra.mxu0 0.0
    %354 = vmatpush.msra.mxu0 0.0
    %355 = vmatpush.msra.mxu0 0.0
    %356 = vmatpush.msra.mxu0 0.0
    %357 = vmatpush.msra.mxu0 0.0
    %358 = vmatpush.msra.mxu0 0.0
    %359 = vmatpush.msra.mxu0 0.0
    %360 = vmatpush.msra.mxu0 0.0
    %361 = vmatpush.msra.mxu0 0.0
    %362 = vmatpush.msra.mxu0 0.0
    %363 = vmatpush.msra.mxu0 0.0
    %364 = vmatpush.msra.mxu0 0.0
    %365 = vmatpush.msra.mxu0 0.0
    %366 = vmatpush.msra.mxu0 %v304
    %367 = vmatpush.msra.mxu0 %v301
    %368 = vmatmul.f32.gmra.mxu0 %v192
    %v369 = vpop.f32.mrf.mxu0
    %v370 = vadd.f32 %v347, %v369
    %371 = vmatmul.f32.gmra.mxu0 %v195
    %v372 = vpop.f32.mrf.mxu0
    %v373 = vadd.f32 %v350, %v372
    %374 = vdwg.mxu0
    %v376 = vsel %vm161, %v103, 0
    %v379 = vsel %vm161, %v104, 0
    %v382 = vsel %vm161, %v105, 0
    %v385 = vsel %vm161, %v106, 0
    %387 = vmatpush.msra.mxu0 0.0
    %388 = vmatpush.msra.mxu0 0.0
    %389 = vmatpush.msra.mxu0 0.0
    %390 = vmatpush.msra.mxu0 0.0
    %391 = vmatpush.msra.mxu0 0.0
    %392 = vmatpush.msra.mxu0 0.0
    %393 = vmatpush.msra.mxu0 0.0
    %394 = vmatpush.msra.mxu0 0.0
    %395 = vmatpush.msra.mxu0 0.0
    %396 = vmatpush.msra.mxu0 0.0
    %397 = vmatpush.msra.mxu0 0.0
    %398 = vmatpush.msra.mxu0 0.0
    %399 = vmatpush.msra.mxu0 0.0
    %400 = vmatpush.msra.mxu0 0.0
    %401 = vmatpush.msra.mxu0 %v218
    %402 = vmatpush.msra.mxu0 %v215
    %403 = vmatmul.f32.gmra.mxu0 %v376
    %v404 = vpop.f32.mrf.mxu0
    %v405 = vadd.f32 0.0, %v404
    %406 = vmatmul.f32.gmra.mxu0 %v379
    %v407 = vpop.f32.mrf.mxu0
    %v408 = vadd.f32 0.0, %v407
    %409 = vmatmul.f32.gmra.mxu0 %v382
    %v410 = vpop.f32.mrf.mxu0
    %v411 = vadd.f32 0.0, %v410
    %412 = vmatmul.f32.gmra.mxu0 %v385
    %v413 = vpop.f32.mrf.mxu0
    %v414 = vadd.f32 0.0, %v413
    %415 = vdwg.mxu0
    %v417 = vsel %vm220, %v405, 0
    %v420 = vsel %vm220, %v408, 0
    %v423 = vsel %vm220, %v411, 0
    %v426 = vsel %vm220, %v414, 0
    %428 = vmatpush.msra.mxu0 0.0
    %429 = vmatpush.msra.mxu0 0.0
    %430 = vmatpush.msra.mxu0 0.0
    %431 = vmatpush.msra.mxu0 0.0
    %432 = vmatpush.msra.mxu0 0.0
    %433 = vmatpush.msra.mxu0 0.0
    %434 = vmatpush.msra.mxu0 0.0
    %435 = vmatpush.msra.mxu0 0.0
    %436 = vmatpush.msra.mxu0 %v114
    %437 = vmatpush.msra.mxu0 %v113
    %438 = vmatpush.msra.mxu0 %v112
    %439 = vmatpush.msra.mxu0 %v111
    %440 = vmatpush.msra.mxu0 %v110
    %441 = vmatpush.msra.mxu0 %v109
    %442 = vmatpush.msra.mxu0 %v108
    %443 = vmatpush.msra.mxu0 %v107
    %444 = vmatmul.f32.gmra.mxu0 %v417
    %v445 = vpop.f32.mrf.mxu0
    %v446 = vadd.f32 0.0, %v445
    %447 = vmatmul.f32.gmra.mxu0 %v420
    %v448 = vpop.f32.mrf.mxu0
    %v449 = vadd.f32 0.0, %v448
    %450 = vmatmul.f32.gmra.mxu0 %v423
    %v451 = vpop.f32.mrf.mxu0
    %v452 = vadd.f32 0.0, %v451
    %453 = vmatmul.f32.gmra.mxu0 %v426
    %v454 = vpop.f32.mrf.mxu0
    %v455 = vadd.f32 0.0, %v454
    %456 = vdwg.mxu0
    %457 = vmatpush.msra.mxu0 %v92
    %458 = vmatpush.msra.mxu0 %v91
    %459 = vmatpush.msra.mxu0 %v90
    %460 = vmatpush.msra.mxu0 %v89
    %461 = vmatpush.msra.mxu0 %v88
    %462 = vmatpush.msra.mxu0 %v87
    %463 = vmatpush.msra.mxu0 %v86
    %464 = vmatpush.msra.mxu0 %v85
    %465 = vmatpush.msra.mxu0 %v84
    %466 = vmatpush.msra.mxu0 %v83
    %467 = vmatpush.msra.mxu0 %v82
    %468 = vmatpush.msra.mxu0 %v81
    %469 = vmatpush.msra.mxu0 %v80
    %470 = vmatpush.msra.mxu0 %v79
    %471 = vmatpush.msra.mxu0 %v78
    %472 = vmatpush.msra.mxu0 %v77
    %473 = vmatmul.f32.gmra.mxu0 %v446
    %v474 = vpop.f32.mrf.mxu0
    %v475 = vadd.f32 0.0, %v474
    %476 = vmatmul.f32.gmra.mxu0 %v449
    %v477 = vpop.f32.mrf.mxu0
    %v478 = vadd.f32 0.0, %v477
    %479 = vmatmul.f32.gmra.mxu0 %v452
    %v480 = vpop.f32.mrf.mxu0
    %v481 = vadd.f32 0.0, %v480
    %482 = vmatmul.f32.gmra.mxu0 %v455
    %v483 = vpop.f32.mrf.mxu0
    %v484 = vadd.f32 0.0, %v483
    %485 = vdwg.mxu0
    %v486 = vsub.f32 %v475, %v279
    %v487 = vsub.f32 %v478, %v279
    %v488 = vsub.f32 %v481, %v279
    %v489 = vsub.f32 %v484, %v279
    %490 = vmatpush.msra.mxu0 0.0
    %491 = vmatpush.msra.mxu0 0.0
    %492 = vmatpush.msra.mxu0 0.0
    %493 = vmatpush.msra.mxu0 0.0
    %494 = vmatpush.msra.mxu0 0.0
    %495 = vmatpush.msra.mxu0 0.0
    %496 = vmatpush.msra.mxu0 0.0
    %497 = vmatpush.msra.mxu0 0.0
    %498 = vmatpush.msra.mxu0 0.0
    %499 = vmatpush.msra.mxu0 0.0
    %500 = vmatpush.msra.mxu0 0.0
    %501 = vmatpush.msra.mxu0 0.0
    %502 = vmatpush.msra.mxu0 0.0
    %503 = vmatpush.msra.mxu0 0.0
    %504 = vmatpush.msra.mxu0 %v373
    %505 = vmatpush.msra.mxu0 %v370
    %506 = vmatmul.f32.gmra.mxu0 %v376
    %v507 = vpop.f32.mrf.mxu0
    %v508 = vadd.f32 0.0, %v507
    %509 = vmatmul.f32.gmra.mxu0 %v379
    %v510 = vpop.f32.mrf.mxu0
    %v511 = vadd.f32 0.0, %v510
    %512 = vmatmul.f32.gmra.mxu0 %v382
    %v513 = vpop.f32.mrf.mxu0
    %v514 = vadd.f32 0.0, %v513
    %515 = vmatmul.f32.gmra.mxu0 %v385
    %v516 = vpop.f32.mrf.mxu0
    %v517 = vadd.f32 0.0, %v516
    %518 = vdwg.mxu0
    %v520 = vsel %vm220, %v508, 0
    %v523 = vsel %vm220, %v511, 0
    %v526 = vsel %vm220, %v514, 0
    %v529 = vsel %vm220, %v517, 0
    %531 = vmatpush.msra.mxu0 0.0
    %532 = vmatpush.msra.mxu0 0.0
    %533 = vmatpush.msra.mxu0 0.0
    %534 = vmatpush.msra.mxu0 0.0
    %535 = vmatpush.msra.mxu0 0.0
    %536 = vmatpush.msra.mxu0 0.0
    %537 = vmatpush.msra.mxu0 0.0
    %538 = vmatpush.msra.mxu0 0.0
    %539 = vmatpush.msra.mxu0 %v114
    %540 = vmatpush.msra.mxu0 %v113
    %541 = vmatpush.msra.mxu0 %v112
    %542 = vmatpush.msra.mxu0 %v111
    %543 = vmatpush.msra.mxu0 %v110
    %544 = vmatpush.msra.mxu0 %v109
    %545 = vmatpush.msra.mxu0 %v108
    %546 = vmatpush.msra.mxu0 %v107
    %547 = vmatmul.f32.gmra.mxu0 %v520
    %v548 = vpop.f32.mrf.mxu0
    %v549 = vadd.f32 0.0, %v548
    %550 = vmatmul.f32.gmra.mxu0 %v523
    %v551 = vpop.f32.mrf.mxu0
    %v552 = vadd.f32 0.0, %v551
    %553 = vmatmul.f32.gmra.mxu0 %v526
    %v554 = vpop.f32.mrf.mxu0
    %v555 = vadd.f32 0.0, %v554
    %556 = vmatmul.f32.gmra.mxu0 %v529
    %v557 = vpop.f32.mrf.mxu0
    %v558 = vadd.f32 0.0, %v557
    %559 = vdwg.mxu0
    %v560 = vsub.f32 %v253, %v218
    %v561 = vmul.f32 %v560, %v560
    %v562 = vsel %vm220, %v561, 0.0
    %563 = vadd.xlane.f32.xlu0 %v562
    %v564 = vpop.xlane.xlu0 %563
    %v565 = vrot.slane %v564, 4
    %v566 = vadd.f32 %v564, %v565
    %v567 = vrot.slane %v566, 2
    %v568 = vadd.f32 %v566, %v567
    %v569 = vrot.slane %v568, 1
    %v570 = vadd.f32 %v568, %v569
    %s571 = vtos %v570
    %s572 = smul.f32 %s571, 0.001953125
    %v573 = vsub.f32 %v253, %v370
    %v574 = vsub.f32 %v254, %v373
    %v575 = vmul.f32 %v573, %v573
    %v576 = vmul.f32 %v574, %v574
    %v577 = vsel %vm220, %v575, 0.0
    %v578 = vsel %vm220, %v576, 0.0
    %v579 = vadd.f32 %v577, %v578
    %580 = vadd.xlane.f32.xlu0 %v579
    %v581 = vpop.xlane.xlu0 %580
    %v582 = vrot.slane %v581, 4
    %v583 = vadd.f32 %v581, %v582
    %v584 = vrot.slane %v583, 2
    %v585 = vadd.f32 %v583, %v584
    %v586 = vrot.slane %v585, 1
    %v587 = vadd.f32 %v585, %v586
    %s588 = vtos %v587
    %s589 = smul.f32 %s588, 0.5
    %s590 = smul.f32 %s589, 0.001953125
    %v591 = vsub.f32 %v486, %v452
    %v592 = vsub.f32 %v487, %v455
    %v593 = vmul.f32 %v591, %v591
    %v594 = vmul.f32 %v592, %v592
    %v595 = vadd.f32 %v593, %v594
    %596 = vadd.xlane.f32.xlu0 %v595
    %v597 = vpop.xlane.xlu0 %596
    %v598 = vrot.slane %v597, 4
    %v599 = vadd.f32 %v597, %v598
    %v600 = vrot.slane %v599, 2
    %v601 = vadd.f32 %v599, %v600
    %v602 = vrot.slane %v601, 1
    %v603 = vadd.f32 %v601, %v602
    %s604 = vtos %v603
    %s605 = smul.f32 %s604, 0.00048828125
    %v606 = vsub.f32 %v549, %v486
    %v607 = vsub.f32 %v552, %v487
    %v608 = vsub.f32 %v555, %v488
    %v609 = vsub.f32 %v558, %v489
    %v610 = vmul.f32 %v606, %v606
    %v611 = vmul.f32 %v607, %v607
    %v612 = vmul.f32 %v608, %v608
    %v613 = vmul.f32 %v609, %v609
    %v614 = vadd.f32 %v610, %v611
    %v615 = vadd.f32 %v614, %v612
    %v616 = vadd.f32 %v615, %v613
    %617 = vadd.xlane.f32.xlu0 %v616
    %v618 = vpop.xlane.xlu0 %617
    %v619 = vrot.slane %v618, 4
    %v620 = vadd.f32 %v618, %v619
    %v621 = vrot.slane %v620, 2
    %v622 = vadd.f32 %v620, %v621
    %v623 = vrot.slane %v622, 1
    %v624 = vadd.f32 %v622, %v623
    %s625 = vtos %v624
    %s626 = smul.f32 %s625, 0.5
    %s627 = smul.f32 %s626, 0.00048828125
    %s628 = sadd.f32 %s572, %s590
    %s629 = sadd.f32 %s628, %s605
    %s630 = sadd.f32 %s629, %s627
    %s631 = scalar_lea.smem [#allocation2], 0
    %632 = sst [smem:[%s631]] %s630
    // Predicated region
    $region46: #{custom_loss.1} parent=1 // pred_check
      _
    $region47: #{custom_loss.1} parent=1 // pred_check_branch
      %634 = sbr.rel (0) target = $region49
    $region48: #{custom_loss.1} parent=1 // pred_region
      %636 = vsyncadd [#allocation3], 0
      %s638 = sshll.u32 %s11, 4
      %s639 = int_to_ptr.hbm [resolvable:$true] %s638
      %641 = dma.smem_to_hbm [#allocation2], 16, %s639, [#allocation3]
    $region49: #{custom_loss.1} parent=1 // pred_fallthru
      _
    // Predicated region
    $region50: #{custom_loss.1} parent=1 // pred_check
      _
    $region51: #{custom_loss.1} parent=1 // pred_check_branch
      %643 = sbr.rel (0) target = $region53
    $region52: #{custom_loss.1} parent=1 // pred_region
      %645 = dma.done [#allocation3], 16
    $region53: #{custom_loss.1} parent=1 // pred_fallthru
      _
    %646 = sfence
    %647 = vsyncpa [#allocation3], 1

</llo_original>
